<compile_context>
chip_gen: v7x
topology: tpu7x:2x2x1
jax: 0.10.0
libtpu: 0.0.40
codegen_flags: <defaults>
</compile_context>

<pallas_src>
import functools

import jax
import jax.numpy as jnp
from jax import lax
from jax.experimental import pallas as pl
from jax.experimental.pallas import tpu as pltpu

INPUT_DIM = 10
ENCODING_DIM = 5
_SUBLANE = 8  # f32 sublane granularity for the second-to-last block dim


def autoencoder_kernel(w1_ref, b1_ref, w2_ref, b2_ref, x_ref, out_ref):
    x = x_ref[...]                                              # (tb, INPUT_DIM) f32
    # encoder: h = x @ w1.T + b1 ; ReLU.  Contraction on both last dims == x @ w1.T,
    # the transpose lives in the MXU operand path (no separate transpose op).
    h = lax.dot_general(x, w1_ref[...], (((1,), (1,)), ((), ())),
                        preferred_element_type=jnp.float32)     # (tb, ENCODING_DIM)
    h = jnp.maximum(h + b1_ref[...], 0.0)                       # ReLU on VPU
    # decoder: y = h @ w2.T + b2 (no activation)
    y = lax.dot_general(h, w2_ref[...], (((1,), (1,)), ((), ())),
                        preferred_element_type=jnp.float32)     # (tb, INPUT_DIM)
    out_ref[...] = (y + b2_ref[...]).astype(out_ref.dtype)


def _round_up(a, m):
    return ((a + m - 1) // m) * m


def _choose_tiling(batch, batch_tile):
    """Minimal 8-row padding; tile divides padded batch; >=2 grid steps when possible."""
    b_min = _round_up(max(batch, 1), _SUBLANE)
    # enough steps that each tile <= batch_tile; at least 2 steps (v7x has 2 TCs)
    n = max(pl.cdiv(b_min, batch_tile), 2 if b_min >= 2 * _SUBLANE else 1)
    tb = _round_up(pl.cdiv(b_min, n), _SUBLANE)
    n = pl.cdiv(b_min, tb)
    return tb, n


@functools.partial(jax.jit, static_argnames=("batch_tile",))
def autoencoder_forward(x, w1, b1, w2, b2, *, batch_tile=4096):
    """x: (B, INPUT_DIM) f32 (PyTorch layout).
    w1: (ENCODING_DIM, INPUT_DIM), b1: (ENCODING_DIM,),
    w2: (INPUT_DIM, ENCODING_DIM), b2: (INPUT_DIM,)  -- PyTorch-native (out, in)."""
    B, D = x.shape
    assert D == INPUT_DIM

    tb, n_tiles = _choose_tiling(B, batch_tile)
    b_pad = tb * n_tiles

    x_p = jnp.pad(x, ((0, b_pad - B), (0, 0))) if b_pad != B else x
    b1r = b1.reshape(1, ENCODING_DIM)
    b2r = b2.reshape(1, INPUT_DIM)

    out = pl.pallas_call(
        autoencoder_kernel,
        out_shape=jax.ShapeDtypeStruct((b_pad, INPUT_DIM), x.dtype),
        grid=(n_tiles,),
        in_specs=[
            # weights/biases: full-array blocks, constant index_map -> VMEM-resident
            pl.BlockSpec((ENCODING_DIM, INPUT_DIM), lambda i: (0, 0)),
            pl.BlockSpec((1, ENCODING_DIM), lambda i: (0, 0)),
            pl.BlockSpec((INPUT_DIM, ENCODING_DIM), lambda i: (0, 0)),
            pl.BlockSpec((1, INPUT_DIM), lambda i: (0, 0)),
            # activations: tiled over the batch (sublane) axis, native layout
            pl.BlockSpec((tb, INPUT_DIM), lambda i: (i, 0)),
        ],
        out_specs=pl.BlockSpec((tb, INPUT_DIM), lambda i: (i, 0)),
        compiler_params=pltpu.CompilerParams(
            dimension_semantics=("parallel",),
        ),
    )(w1, b1r, w2, b2r, x_p)

    return out[:B] if b_pad != B else out


def init_params(key):
    """Deterministic init mimicking nn.Linear's uniform(-1/sqrt(fan_in), 1/sqrt(fan_in)).
    Stored in PyTorch-native (out, in) layout."""
    k1, k2, k3, k4 = jax.random.split(key, 4)
    bound1 = 1.0 / jnp.sqrt(float(INPUT_DIM))
    bound2 = 1.0 / jnp.sqrt(float(ENCODING_DIM))
    w1 = jax.random.uniform(k1, (ENCODING_DIM, INPUT_DIM), jnp.float32, -bound1, bound1)
    b1 = jax.random.uniform(k2, (ENCODING_DIM,), jnp.float32, -bound1, bound1)
    w2 = jax.random.uniform(k3, (INPUT_DIM, ENCODING_DIM), jnp.float32, -bound2, bound2)
    b2 = jax.random.uniform(k4, (INPUT_DIM,), jnp.float32, -bound2, bound2)
    return w1, b1, w2, b2


def reference_forward(x, w1, b1, w2, b2):
    hp = lax.Precision.HIGHEST
    h = jnp.maximum(jnp.einsum("bi,ei->be", x, w1, precision=hp) + b1, 0.0)
    return jnp.einsum("be,oe->bo", h, w2, precision=hp) + b2


if __name__ == "__main__":
    key = jax.random.PRNGKey(0)
    kp, kx1, kx2 = jax.random.split(key, 3)
    w1, b1, w2, b2 = init_params(kp)

    # small batch (2-step grid, minimal padding path)
    B = 16
    x = jax.random.normal(kx1, (B, INPUT_DIM), jnp.float32)
    out = jax.block_until_ready(autoencoder_forward(x, w1, b1, w2, b2))
    ref = reference_forward(x, w1, b1, w2, b2)
    assert out.shape == (B, INPUT_DIM)
    assert jnp.allclose(out, ref, atol=2e-3, rtol=2e-3), "mismatch vs reference (B=16)"

    # original-script batch size (310 = 300 normal + 10 anomalies; not 8-aligned)
    B2 = 310
    x2 = jax.random.normal(kx2, (B2, INPUT_DIM), jnp.float32)
    out2 = jax.block_until_ready(autoencoder_forward(x2, w1, b1, w2, b2))
    ref2 = reference_forward(x2, w1, b1, w2, b2)
    assert out2.shape == (B2, INPUT_DIM)
    assert jnp.allclose(out2, ref2, atol=2e-3, rtol=2e-3), "mismatch vs reference (B=310)"

    print("KERNEL_OK")
</pallas_src>

<mosaic_0001>
module attributes {stable_mosaic.version = 11 : i64} {
  func.func @autoencoder_kernel(%arg0: i32, %arg1: memref<5x10xf32, #tpu.memory_space<vmem>>, %arg2: memref<1x5xf32, #tpu.memory_space<vmem>>, %arg3: memref<10x5xf32, #tpu.memory_space<vmem>>, %arg4: memref<1x10xf32, #tpu.memory_space<vmem>>, %arg5: memref<8x10xf32, #tpu.memory_space<vmem>>, %arg6: memref<8x10xf32, #tpu.memory_space<vmem>>) attributes {dimension_semantics = [#tpu.dimension_semantics<parallel>], iteration_bounds = array<i64: 2>, scalar_prefetch = 0 : i64, scratch_operands = 0 : i64, tpu.core_type = #tpu.core_type<tc>, window_params = [{pipeline_mode = #tpu.pipeline_mode<synchronous>, transform_indices = @transform_0, window_bounds = array<i64: 5, 10>}, {pipeline_mode = #tpu.pipeline_mode<synchronous>, transform_indices = @transform_1, window_bounds = array<i64: 1, 5>}, {pipeline_mode = #tpu.pipeline_mode<synchronous>, transform_indices = @transform_2, window_bounds = array<i64: 10, 5>}, {pipeline_mode = #tpu.pipeline_mode<synchronous>, transform_indices = @transform_3, window_bounds = array<i64: 1, 10>}, {transform_indices = @transform_4, window_bounds = array<i64: 8, 10>}, {transform_indices = @transform_5, window_bounds = array<i64: 8, 10>}]} {
    %c0 = arith.constant 0 : index
    %c0_0 = arith.constant 0 : index
    %0 = vector.load %arg5[%c0, %c0_0] : memref<8x10xf32, #tpu.memory_space<vmem>>, vector<8x10xf32>
    %c0_1 = arith.constant 0 : index
    %c0_2 = arith.constant 0 : index
    %1 = vector.load %arg1[%c0_1, %c0_2] : memref<5x10xf32, #tpu.memory_space<vmem>>, vector<5x10xf32>
    %cst = arith.constant dense<0.000000e+00> : vector<8x5xf32>
    %2 = tpu.matmul %0, %1, %cst {dimension_numbers = #tpu.dot_dimension_numbers<[1], [1], [0], [0], [0, 0, 1, 0], [], []>} : vector<8x10xf32>, vector<5x10xf32>, vector<8x5xf32> -> vector<8x5xf32>
    %c0_3 = arith.constant 0 : index
    %c0_4 = arith.constant 0 : index
    %3 = vector.load %arg2[%c0_3, %c0_4] : memref<1x5xf32, #tpu.memory_space<vmem>>, vector<1x5xf32>
    %4 = vector.broadcast %3 : vector<1x5xf32> to vector<8x5xf32>
    %5 = arith.addf %2, %4 : vector<8x5xf32>
    %cst_5 = arith.constant 0.000000e+00 : f32
    %6 = vector.broadcast %cst_5 : f32 to vector<8x5xf32>
    %7 = arith.maximumf %5, %6 : vector<8x5xf32>
    %c0_6 = arith.constant 0 : index
    %c0_7 = arith.constant 0 : index
    %8 = vector.load %arg3[%c0_6, %c0_7] : memref<10x5xf32, #tpu.memory_space<vmem>>, vector<10x5xf32>
    %cst_8 = arith.constant dense<0.000000e+00> : vector<8x10xf32>
    %9 = tpu.matmul %7, %8, %cst_8 {dimension_numbers = #tpu.dot_dimension_numbers<[1], [1], [0], [0], [0, 0, 1, 0], [], []>} : vector<8x5xf32>, vector<10x5xf32>, vector<8x10xf32> -> vector<8x10xf32>
    %c0_9 = arith.constant 0 : index
    %c0_10 = arith.constant 0 : index
    %10 = vector.load %arg4[%c0_9, %c0_10] : memref<1x10xf32, #tpu.memory_space<vmem>>, vector<1x10xf32>
    %11 = vector.broadcast %10 : vector<1x10xf32> to vector<8x10xf32>
    %12 = arith.addf %9, %11 : vector<8x10xf32>
    %c0_11 = arith.constant 0 : index
    %c0_12 = arith.constant 0 : index
    %13 = vector.load %arg6[%c0_11, %c0_12] : memref<8x10xf32, #tpu.memory_space<vmem>>, vector<8x10xf32>
    tpu.vector_store %arg6[%c0_11, %c0_12], %12 {strides = array<i32>} : memref<8x10xf32, #tpu.memory_space<vmem>>, vector<8x10xf32>,
    return
  }
  func.func @transform_0(%arg0: i32) -> (i32, i32) {
    %c0_i32 = arith.constant 0 : i32
    %c0_i32_0 = arith.constant 0 : i32
    %c0_i32_1 = arith.constant 0 : i32
    return %c0_i32, %c0_i32_0 : i32, i32
  }
  func.func @transform_1(%arg0: i32) -> (i32, i32) {
    %c0_i32 = arith.constant 0 : i32
    %c0_i32_0 = arith.constant 0 : i32
    %c0_i32_1 = arith.constant 0 : i32
    return %c0_i32, %c0_i32_0 : i32, i32
  }
  func.func @transform_2(%arg0: i32) -> (i32, i32) {
    %c0_i32 = arith.constant 0 : i32
    %c0_i32_0 = arith.constant 0 : i32
    %c0_i32_1 = arith.constant 0 : i32
    return %c0_i32, %c0_i32_0 : i32, i32
  }
  func.func @transform_3(%arg0: i32) -> (i32, i32) {
    %c0_i32 = arith.constant 0 : i32
    %c0_i32_0 = arith.constant 0 : i32
    %c0_i32_1 = arith.constant 0 : i32
    return %c0_i32, %c0_i32_0 : i32, i32
  }
  func.func @transform_4(%arg0: i32) -> (i32, i32) {
    %c0_i32 = arith.constant 0 : i32
    %c0_i32_0 = arith.constant 0 : i32
    return %arg0, %c0_i32 : i32, i32
  }
  func.func @transform_5(%arg0: i32) -> (i32, i32) {
    %c0_i32 = arith.constant 0 : i32
    %c0_i32_0 = arith.constant 0 : i32
    return %arg0, %c0_i32 : i32, i32
  }
}

</mosaic_0001>

<llo_original>
// kernel: autoencoder_forward.1
$region0: #{autoencoder_forward.1}
  #allocation0 [shape = 'u32[]', space=smem, size = 0x4, offset = 0x4, fixed_abs, tag = 'smem constant byte address 0x4 - core index']
  #allocation1 [shape = 'u32[144,128]{1,0:T(1,128)}', space=vmem, size = 0x12000, scoped, tag = 'internal scratch']
  %s0 = inlined_call_operand.vmem [shape: f32[5,10], index: 0, kind: input, shape index: {}]
  %s1 = inlined_call_operand.vmem [shape: f32[1,5], index: 1, kind: input, shape index: {}]
  %s2 = inlined_call_operand.vmem [shape: f32[10,5], index: 2, kind: input, shape index: {}]
  %s3 = inlined_call_operand.vmem [shape: f32[1,10], index: 3, kind: input, shape index: {}]
  %s4 = inlined_call_operand.vmem [shape: f32[16,10], index: 4, kind: input, shape index: {}]
  %s5 = inlined_call_operand.hbm [shape: f32[16,10], index: 5, kind: output, shape index: {}]
  %s6 = sld [smem:[#allocation0]]
  $region53: #{autoencoder_forward.1} parent=0
    _
  %s8 = ssub.s32 1, %s6
  %s9 = scalar_select 0, %s8, %s6
  $region1: #{autoencoder_forward.1} parent=0
    #allocation2 [shape = 'u8[8192]{0}', space=vmem, size = 0x2000, scoped, tag = 'output window, operand 0']
    #allocation3 [shape = 's32[2]{0}', space=sflag, size = 0x8, scoped, tag = 'scoped memory for autoencoder_forward.1']
    %10 = vsyncpa [#allocation3], 0
    %s11 = scalar_lea.sflag [#allocation3], 1
    %12 = vsyncpa %s11, 0
    loop: start=0, step=1, limit=4
    $region2: #{autoencoder_forward.1} parent=1 // loop_pre_header
      _
    $region3: #{autoencoder_forward.1} parent=1 // loop_header
      %s14 = sphi 0, %s18
      %p15 = scmp.ge.s32.totalorder %s14, 4
      %s22 = sphi 0, %s22
      %s24 = sphi 0, %s22
      %s25 = sphi 0, %s24
      %s39 = sphi 0, %s25
      %s43 = sphi 0, %s43
      %s45 = sphi 0, %s43
      %s46 = sphi 0, %s45
      %s60 = sphi 0, %s46
      %s64 = sphi 0, %s64
      %s66 = sphi 0, %s64
      %s67 = sphi 0, %s66
      %s81 = sphi 0, %s67
      %s85 = sphi 0, %s85
      %s87 = sphi 0, %s85
      %s88 = sphi 0, %s87
      %s102 = sphi 0, %s88
      %s108 = sphi 0, %s110
      %s111 = sphi 0, %s108
      %s112 = sphi 0, %s111
      %s128 = sphi 0, %s112
      %s134 = sphi 0, %s136
      %s137 = sphi 0, %s134
      %s138 = sphi 0, %s137
      %s154 = sphi 0, %s138
    $region4: #{autoencoder_forward.1} parent=1 // loop_header_branch
      %17 = sbr.rel (%p15) target = $region8
    $region5: #{autoencoder_forward.1} parent=1 // loop_body
      %s19 = ssub.s32 %s14, 1
      %s20 = ssub.s32 %s14, 2
      %s21 = sadd.s32 %s14, 1
      %s23 = sadd.s32 %s22, 1
      %p26 = scmp.eq.s32.totalorder %s14, 1
      %p27 = scmp.ne.s32.totalorder %s22, %s24
      %p28 = scmp.eq.s32.totalorder %s14, 0
      %p29 = por %p27, %p28
      %p30 = scmp.ne.s32.totalorder %s22, %s24
      %p31 = scmp.eq.s32.totalorder %s19, 1
      %p32 = por %p30, %p31
      %p33 = scmp.ne.s32.totalorder %s24, %s25
      %p34 = scmp.eq.s32.totalorder %s19, 0
      %p35 = por %p33, %p34
      %p36 = scmp.ne.s32.totalorder %s24, %s25
      %p37 = scmp.eq.s32.totalorder %s20, 1
      %p38 = por %p36, %p37
      %p40 = scmp.ne.s32.totalorder %s25, %s39
      %p41 = scmp.eq.s32.totalorder %s20, 0
      %p42 = por %p40, %p41
      %s44 = sadd.s32 %s43, 1
      %p47 = scmp.eq.s32.totalorder %s14, 1
      %p48 = scmp.ne.s32.totalorder %s43, %s45
      %p49 = scmp.eq.s32.totalorder %s14, 0
      %p50 = por %p48, %p49
      %p51 = scmp.ne.s32.totalorder %s43, %s45
      %p52 = scmp.eq.s32.totalorder %s19, 1
      %p53 = por %p51, %p52
      %p54 = scmp.ne.s32.totalorder %s45, %s46
      %p55 = scmp.eq.s32.totalorder %s19, 0
      %p56 = por %p54, %p55
      %p57 = scmp.ne.s32.totalorder %s45, %s46
      %p58 = scmp.eq.s32.totalorder %s20, 1
      %p59 = por %p57, %p58
      %p61 = scmp.ne.s32.totalorder %s46, %s60
      %p62 = scmp.eq.s32.totalorder %s20, 0
      %p63 = por %p61, %p62
      %s65 = sadd.s32 %s64, 1
      %p68 = scmp.eq.s32.totalorder %s14, 1
      %p69 = scmp.ne.s32.totalorder %s64, %s66
      %p70 = scmp.eq.s32.totalorder %s14, 0
      %p71 = por %p69, %p70
      %p72 = scmp.ne.s32.totalorder %s64, %s66
      %p73 = scmp.eq.s32.totalorder %s19, 1
      %p74 = por %p72, %p73
      %p75 = scmp.ne.s32.totalorder %s66, %s67
      %p76 = scmp.eq.s32.totalorder %s19, 0
      %p77 = por %p75, %p76
      %p78 = scmp.ne.s32.totalorder %s66, %s67
      %p79 = scmp.eq.s32.totalorder %s20, 1
      %p80 = por %p78, %p79
      %p82 = scmp.ne.s32.totalorder %s67, %s81
      %p83 = scmp.eq.s32.totalorder %s20, 0
      %p84 = por %p82, %p83
      %s86 = sadd.s32 %s85, 1
      %p89 = scmp.eq.s32.totalorder %s14, 1
      %p90 = scmp.ne.s32.totalorder %s85, %s87
      %p91 = scmp.eq.s32.totalorder %s14, 0
      %p92 = por %p90, %p91
      %p93 = scmp.ne.s32.totalorder %s85, %s87
      %p94 = scmp.eq.s32.totalorder %s19, 1
      %p95 = por %p93, %p94
      %p96 = scmp.ne.s32.totalorder %s87, %s88
      %p97 = scmp.eq.s32.totalorder %s19, 0
      %p98 = por %p96, %p97
      %p99 = scmp.ne.s32.totalorder %s87, %s88
      %p100 = scmp.eq.s32.totalorder %s20, 1
      %p101 = por %p99, %p100
      %p103 = scmp.ne.s32.totalorder %s88, %s102
      %p104 = scmp.eq.s32.totalorder %s20, 0
      %p105 = por %p103, %p104
      %s106 = ssub.s32 %s14, %s21
      %p107 = scmp.eq.s32.totalorder %s106, 0
      %s109 = sadd.s32 %s108, 1
      %s110 = scalar_select %p107, %s108, %s109
      %p113 = pneg %p107
      %p114 = scmp.eq.s32.totalorder %s14, 1
      %p115 = por %p113, %p114
      %p116 = scmp.ne.s32.totalorder %s108, %s111
      %p117 = scmp.eq.s32.totalorder %s14, 0
      %p118 = por %p116, %p117
      %p119 = scmp.ne.s32.totalorder %s108, %s111
      %p120 = scmp.eq.s32.totalorder %s19, 1
      %p121 = por %p119, %p120
      %p122 = scmp.ne.s32.totalorder %s111, %s112
      %p123 = scmp.eq.s32.totalorder %s19, 0
      %p124 = por %p122, %p123
      %p125 = scmp.ne.s32.totalorder %s111, %s112
      %p126 = scmp.eq.s32.totalorder %s20, 1
      %p127 = por %p125, %p126
      %p129 = scmp.ne.s32.totalorder %s112, %s128
      %p130 = scmp.eq.s32.totalorder %s20, 0
      %p131 = por %p129, %p130
      %s132 = ssub.s32 %s14, %s21
      %p133 = scmp.eq.s32.totalorder %s132, 0
      %s135 = sadd.s32 %s134, 1
      %s136 = scalar_select %p133, %s134, %s135
      %p139 = pneg %p133
      %p140 = scmp.eq.s32.totalorder %s14, 1
      %p141 = por %p139, %p140
      %p142 = scmp.ne.s32.totalorder %s134, %s137
      %p143 = scmp.eq.s32.totalorder %s14, 0
      %p144 = por %p142, %p143
      %p145 = scmp.ne.s32.totalorder %s134, %s137
      %p146 = scmp.eq.s32.totalorder %s19, 1
      %p147 = por %p145, %p146
      %p148 = scmp.ne.s32.totalorder %s137, %s138
      %p149 = scmp.eq.s32.totalorder %s19, 0
      %p150 = por %p148, %p149
      %p151 = scmp.ne.s32.totalorder %s137, %s138
      %p152 = scmp.eq.s32.totalorder %s20, 1
      %p153 = por %p151, %p152
      %p155 = scmp.ne.s32.totalorder %s138, %s154
      %p156 = scmp.eq.s32.totalorder %s20, 0
      %p157 = por %p155, %p156
      %p158 = scmp.le.s32.totalorder 1, %s14
      %p159 = scmp.lt.s32.totalorder %s14, 3
      %p160 = pnand %p158, %p159
      %p161 = pneg %p160
      // Predicated region
      $region9: #{autoencoder_forward.1} parent=5 // pred_check
        _
      $region10: #{autoencoder_forward.1} parent=5 // pred_check_branch
        %163 = sbr.rel (%p160) target = $region12
      $region11: #{autoencoder_forward.1} parent=5 // pred_region
        %s164 = ssub.s32 %s14, 1
        // Predicated region
        $region13: #{autoencoder_forward.1} parent=11 // pred_check
          %p165 = pneg %p35
        $region14: #{autoencoder_forward.1} parent=11 // pred_check_branch
          %167 = sbr.rel (%p165) target = $region16
        $region15: #{autoencoder_forward.1} parent=11 // pred_region
          _
        $region16: #{autoencoder_forward.1} parent=11 // pred_fallthru
          _
        // Predicated region
        $region17: #{autoencoder_forward.1} parent=11 // pred_check
          %p168 = pneg %p56
        $region18: #{autoencoder_forward.1} parent=11 // pred_check_branch
          %170 = sbr.rel (%p168) target = $region20
        $region19: #{autoencoder_forward.1} parent=11 // pred_region
          _
        $region20: #{autoencoder_forward.1} parent=11 // pred_fallthru
          _
        // Predicated region
        $region21: #{autoencoder_forward.1} parent=11 // pred_check
          %p171 = pneg %p77
        $region22: #{autoencoder_forward.1} parent=11 // pred_check_branch
          %173 = sbr.rel (%p171) target = $region24
        $region23: #{autoencoder_forward.1} parent=11 // pred_region
          _
        $region24: #{autoencoder_forward.1} parent=11 // pred_fallthru
          _
        // Predicated region
        $region25: #{autoencoder_forward.1} parent=11 // pred_check
          %p174 = pneg %p98
        $region26: #{autoencoder_forward.1} parent=11 // pred_check_branch
          %176 = sbr.rel (%p174) target = $region28
        $region27: #{autoencoder_forward.1} parent=11 // pred_region
          _
        $region28: #{autoencoder_forward.1} parent=11 // pred_fallthru
          _
      $region12: #{autoencoder_forward.1} parent=5 // pred_fallthru
        _
      %p177 = scmp.lt.s32.totalorder %s14, 2
      // Predicated region
      $region29: #{autoencoder_forward.1} parent=5 // pred_check
        %p178 = pneg %p177
      $region30: #{autoencoder_forward.1} parent=5 // pred_check_branch
        %180 = sbr.rel (%p178) target = $region32
      $region31: #{autoencoder_forward.1} parent=5 // pred_region
        // Predicated region
        $region33: #{autoencoder_forward.1} parent=31 // pred_check
          %p181 = pneg %p118
        $region34: #{autoencoder_forward.1} parent=31 // pred_check_branch
          %183 = sbr.rel (%p181) target = $region36
        $region35: #{autoencoder_forward.1} parent=31 // pred_region
          %p184 = scmp.lt.s32.totalorder %s14, 1
          %s185 = scalar_select %p184, %s14, 1
          %s186 = smul.addr %s185, 8
          %s187 = scalar_lea.vmem %s4, %s186
        $region36: #{autoencoder_forward.1} parent=31 // pred_fallthru
          _
      $region32: #{autoencoder_forward.1} parent=5 // pred_fallthru
        _
      %p188 = scmp.le.s32.totalorder 1, %s14
      %p189 = scmp.lt.s32.totalorder %s14, 3
      %p190 = pnand %p188, %p189
      %p191 = pneg %p190
      // Predicated region
      $region37: #{autoencoder_forward.1} parent=5 // pred_check
        _
      $region38: #{autoencoder_forward.1} parent=5 // pred_check_branch
        %193 = sbr.rel (%p190) target = $region40
      $region39: #{autoencoder_forward.1} parent=5 // pred_region
        %s194 = ssub.s32 %s14, 1
        %p195 = pneg %p35
        %p196 = pneg %p32
        %p197 = pneg %p56
        %p198 = pneg %p53
        %p199 = pneg %p77
        %p200 = pneg %p74
        %p201 = pneg %p98
        %p202 = pneg %p95
        %p203 = scmp.lt.s32.totalorder %s19, 1
        %s204 = scalar_select %p203, %s19, 1
        %s205 = smul.addr %s204, 8
        %s206 = scalar_lea.vmem %s4, %s205
        %p207 = pneg %p124
        %p208 = pneg %p121
        %p209 = pneg %p150
        %p210 = pneg %p147
        %s211 = sand.u32 %s137, 1
        %s212 = scalar_lea.sflag [#allocation3], %s211
        %s213 = sand.u32 %s137, 1
        %s214 = smul.addr %s213, 8
        %s215 = scalar_lea.vmem [#allocation2], %s214
        %p216 = scmp.lt.s32.totalorder %s19, 1
        %s217 = scalar_select %p216, %s19, 1
        %s218 = smul.addr %s217, 8
        %s219 = scalar_lea.vmem %s4, %s218
        %v220 = vld [vmem:[%s219] sm:$0xff]
        %v221 = vld [vmem:[%s0] sm:$0x1f]
        %v222 = vld [vmem:[%s1] sm:$0x1]
        %v224 = vlaneseq
        %v225 = vshrl.u32 %v224, 7
        %v226 = vsub.s32 0, %v225
        %v227 = vrot.slane %v222, %v226
        %vm229 = vcmask 80896
        %v231 = vsel %vm229, %v220, 0
        %v234 = vsel %vm229, %v221, 0
        %236 = vmatprep.subr.mxu0 0.0
        %237 = vmatpush1.xpose.msra.mxu0 %v234
        %238 = vmatprep.subr.mxu0 0.0
        %239 = vmatpush1.xpose.msra.mxu0 0.0
        %240 = vmatprep.subr.mxu0 0.0
        %241 = vmatpush1.xpose.msra.mxu0 0.0
        %242 = vmatprep.subr.mxu0 0.0
        %243 = vmatpush1.xpose.msra.mxu0 0.0
        %244 = vmatprep.subr.mxu0 0.0
        %245 = vmatpush1.xpose.msra.mxu0 0.0
        %246 = vmatprep.subr.mxu0 0.0
        %247 = vmatpush1.xpose.msra.mxu0 0.0
        %248 = vmatprep.subr.mxu0 0.0
        %249 = vmatpush1.xpose.msra.mxu0 0.0
        %250 = vmatprep.subr.mxu0 0.0
        %251 = vmatpush1.xpose.msra.mxu0 0.0
        %252 = vmatprep.subr.mxu0 0.0
        %253 = vmatpush1.xpose.msra.mxu0 0.0
        %254 = vmatprep.subr.mxu0 0.0
        %255 = vmatpush1.xpose.msra.mxu0 0.0
        %256 = vmatprep.subr.mxu0 0.0
        %257 = vmatpush1.xpose.msra.mxu0 0.0
        %258 = vmatprep.subr.mxu0 0.0
        %259 = vmatpush1.xpose.msra.mxu0 0.0
        %260 = vmatprep.subr.mxu0 0.0
        %261 = vmatpush1.xpose.msra.mxu0 0.0
        %262 = vmatprep.subr.mxu0 0.0
        %263 = vmatpush1.xpose.msra.mxu0 0.0
        %264 = vmatprep.subr.mxu0 0.0
        %265 = vmatpush1.xpose.msra.mxu0 0.0
        %266 = vmatprep.subr.mxu0 0.0
        %267 = vmatpush1.xpose.msra.mxu0 0.0
        %268 = vmatprep.subr.mxu0 0.0
        %269 = vmatpush1.xpose.msra.mxu0 0.0
        %270 = vmatprep.subr.mxu0 0.0
        %271 = vmatpush1.xpose.msra.mxu0 0.0
        %272 = vmatprep.subr.mxu0 0.0
        %273 = vmatpush1.xpose.msra.mxu0 0.0
        %274 = vmatprep.subr.mxu0 0.0
        %275 = vmatpush1.xpose.msra.mxu0 0.0
        %276 = vmatprep.subr.mxu0 0.0
        %277 = vmatpush1.xpose.msra.mxu0 0.0
        %278 = vmatprep.subr.mxu0 0.0
        %279 = vmatpush1.xpose.msra.mxu0 0.0
        %280 = vmatprep.subr.mxu0 0.0
        %281 = vmatpush1.xpose.msra.mxu0 0.0
        %282 = vmatprep.subr.mxu0 0.0
        %283 = vmatpush1.xpose.msra.mxu0 0.0
        %284 = vmatprep.subr.mxu0 0.0
        %285 = vmatpush1.xpose.msra.mxu0 0.0
        %286 = vmatprep.subr.mxu0 0.0
        %287 = vmatpush1.xpose.msra.mxu0 0.0
        %288 = vmatprep.subr.mxu0 0.0
        %289 = vmatpush1.xpose.msra.mxu0 0.0
        %290 = vmatprep.subr.mxu0 0.0
        %291 = vmatpush1.xpose.msra.mxu0 0.0
        %292 = vmatprep.subr.mxu0 0.0
        %293 = vmatpush1.xpose.msra.mxu0 0.0
        %294 = vmatprep.subr.mxu0 0.0
        %295 = vmatpush1.xpose.msra.mxu0 0.0
        %296 = vmatprep.subr.mxu0 0.0
        %297 = vmatpush1.xpose.msra.mxu0 0.0
        %298 = vmatprep.subr.mxu0 0.0
        %299 = vmatpush1.xpose.msra.mxu0 0.0
        %300 = vmatprep.mubr.f32.mxu0 0.0
        %301 = vmatmul.mubr.f32.gmra.mrb[0].mxu0 %v231
        %v302 = vpop.f32.mrb[0].mxu0
        %v303 = vadd.f32 %v227, %v302
        %v304 = vpop.f32.mrb[0].mxu0
        %305 = vdwg.mxu0
        %v306 = vmax.f32 %v303, 0.0
        %v307 = vld [vmem:[%s2] sm:$0xff]
        %v308 = vld [vmem:[%s2 + $0x8] sm:$0x3]
        %v309 = vld [vmem:[%s3] sm:$0x1]
        %v311 = vlaneseq
        %v312 = vshrl.u32 %v311, 7
        %v313 = vsub.s32 0, %v312
        %v314 = vrot.slane %v309, %v313
        %vm316 = vcmask 39936
        %v318 = vsel %vm316, %v306, 0
        %v321 = vsel %vm316, %v307, 0
        %v324 = vsel %vm316, %v308, 0
        %326 = vmatprep.subr.mxu0 0.0
        %327 = vmatpush1.xpose.msra.mxu0 %v321
        %328 = vmatprep.subr.mxu0 0.0
        %329 = vmatpush1.xpose.msra.mxu0 %v324
        %330 = vmatprep.subr.mxu0 0.0
        %331 = vmatpush1.xpose.msra.mxu0 0.0
        %332 = vmatprep.subr.mxu0 0.0
        %333 = vmatpush1.xpose.msra.mxu0 0.0
        %334 = vmatprep.subr.mxu0 0.0
        %335 = vmatpush1.xpose.msra.mxu0 0.0
        %336 = vmatprep.subr.mxu0 0.0
        %337 = vmatpush1.xpose.msra.mxu0 0.0
        %338 = vmatprep.subr.mxu0 0.0
        %339 = vmatpush1.xpose.msra.mxu0 0.0
        %340 = vmatprep.subr.mxu0 0.0
        %341 = vmatpush1.xpose.msra.mxu0 0.0
        %342 = vmatprep.subr.mxu0 0.0
        %343 = vmatpush1.xpose.msra.mxu0 0.0
        %344 = vmatprep.subr.mxu0 0.0
        %345 = vmatpush1.xpose.msra.mxu0 0.0
        %346 = vmatprep.subr.mxu0 0.0
        %347 = vmatpush1.xpose.msra.mxu0 0.0
        %348 = vmatprep.subr.mxu0 0.0
        %349 = vmatpush1.xpose.msra.mxu0 0.0
        %350 = vmatprep.subr.mxu0 0.0
        %351 = vmatpush1.xpose.msra.mxu0 0.0
        %352 = vmatprep.subr.mxu0 0.0
        %353 = vmatpush1.xpose.msra.mxu0 0.0
        %354 = vmatprep.subr.mxu0 0.0
        %355 = vmatpush1.xpose.msra.mxu0 0.0
        %356 = vmatprep.subr.mxu0 0.0
        %357 = vmatpush1.xpose.msra.mxu0 0.0
        %358 = vmatprep.subr.mxu0 0.0
        %359 = vmatpush1.xpose.msra.mxu0 0.0
        %360 = vmatprep.subr.mxu0 0.0
        %361 = vmatpush1.xpose.msra.mxu0 0.0
        %362 = vmatprep.subr.mxu0 0.0
        %363 = vmatpush1.xpose.msra.mxu0 0.0
        %364 = vmatprep.subr.mxu0 0.0
        %365 = vmatpush1.xpose.msra.mxu0 0.0
        %366 = vmatprep.subr.mxu0 0.0
        %367 = vmatpush1.xpose.msra.mxu0 0.0
        %368 = vmatprep.subr.mxu0 0.0
        %369 = vmatpush1.xpose.msra.mxu0 0.0
        %370 = vmatprep.subr.mxu0 0.0
        %371 = vmatpush1.xpose.msra.mxu0 0.0
        %372 = vmatprep.subr.mxu0 0.0
        %373 = vmatpush1.xpose.msra.mxu0 0.0
        %374 = vmatprep.subr.mxu0 0.0
        %375 = vmatpush1.xpose.msra.mxu0 0.0
        %376 = vmatprep.subr.mxu0 0.0
        %377 = vmatpush1.xpose.msra.mxu0 0.0
        %378 = vmatprep.subr.mxu0 0.0
        %379 = vmatpush1.xpose.msra.mxu0 0.0
        %380 = vmatprep.subr.mxu0 0.0
        %381 = vmatpush1.xpose.msra.mxu0 0.0
        %382 = vmatprep.subr.mxu0 0.0
        %383 = vmatpush1.xpose.msra.mxu0 0.0
        %384 = vmatprep.subr.mxu0 0.0
        %385 = vmatpush1.xpose.msra.mxu0 0.0
        %386 = vmatprep.subr.mxu0 0.0
        %387 = vmatpush1.xpose.msra.mxu0 0.0
        %388 = vmatprep.subr.mxu0 0.0
        %389 = vmatpush1.xpose.msra.mxu0 0.0
        %390 = vmatprep.mubr.f32.mxu0 0.0
        %391 = vmatmul.mubr.f32.gmra.mrb[0].mxu0 %v318
        %v392 = vpop.f32.mrb[0].mxu0
        %v393 = vadd.f32 %v314, %v392
        %v394 = vpop.f32.mrb[0].mxu0
        %395 = vdwg.mxu0
        %396 = vst.msk [vmem:[%s215] sm:$0xff] %vm229, %v393
        %s397 = sand.u32 %s137, 1
        %s398 = scalar_lea.sflag [#allocation3], %s397
        %s399 = sand.u32 %s137, 1
        %s400 = smul.addr %s399, 8
        %s401 = scalar_lea.vmem [#allocation2], %s400
        // Predicated region
        $region41: #{autoencoder_forward.1} parent=39 // pred_check
          %p402 = pneg %p147
        $region42: #{autoencoder_forward.1} parent=39 // pred_check_branch
          %404 = sbr.rel (%p402) target = $region44
        $region43: #{autoencoder_forward.1} parent=39 // pred_region
          %s406 = ssub.s32 128, 128
          %407 = vsyncadd %s398, %s406
          %s408 = smul.addr %s19, 128
          %s409 = scalar_lea.hbm %s5, %s408
          %s411 = sshll.u32 %s401, 4
          %s412 = int_to_ptr.vmem [resolvable:$true] %s411
          %414 = dma.vmem_to_hbm [thread:$0]  %s412, 128, %s409, %s398
        $region44: #{autoencoder_forward.1} parent=39 // pred_fallthru
          _
      $region40: #{autoencoder_forward.1} parent=5 // pred_fallthru
        _
      %p415 = scmp.le.s32.totalorder 2, %s14
      // Predicated region
      $region45: #{autoencoder_forward.1} parent=5 // pred_check
        %p416 = pneg %p415
      $region46: #{autoencoder_forward.1} parent=5 // pred_check_branch
        %418 = sbr.rel (%p416) target = $region48
      $region47: #{autoencoder_forward.1} parent=5 // pred_region
        %s419 = ssub.s32 %s14, 2
        // Predicated region
        $region49: #{autoencoder_forward.1} parent=47 // pred_check
          %p420 = pneg %p153
        $region50: #{autoencoder_forward.1} parent=47 // pred_check_branch
          %422 = sbr.rel (%p420) target = $region52
        $region51: #{autoencoder_forward.1} parent=47 // pred_region
          %s423 = sand.u32 %s138, 1
          %s424 = scalar_lea.sflag [#allocation3], %s423
          %s425 = sand.u32 %s138, 1
          %s426 = smul.addr %s425, 8
          %s427 = scalar_lea.vmem [#allocation2], %s426
          %428 = dma.done %s424, 128
        $region52: #{autoencoder_forward.1} parent=47 // pred_fallthru
          _
      $region48: #{autoencoder_forward.1} parent=5 // pred_fallthru
        _
    $region6: #{autoencoder_forward.1} parent=1 // loop_footer
      %s18 = sadd.s32 1, %s14
    $region7: #{autoencoder_forward.1} parent=1 // loop_footer_branch
      %13 = sbr.rel target = $region3
    $region8: #{autoencoder_forward.1} parent=1 // loop_exit
      _
    %429 = vsyncpa [#allocation3], 1
    %s430 = scalar_lea.sflag [#allocation3], 1
    %431 = vsyncpa %s430, 1

</llo_original>
